<compile_context>
chip_gen: v5e
topology: v5e:2x2
jax: 0.10.0
libtpu: 0.0.40
codegen_flags: <defaults>
</compile_context>

<pallas_src>
import jax
import jax.numpy as jnp
from jax.experimental import pallas as pl
from jax.experimental.pallas import tpu as pltpu


def _round_up(x, m):
    return (x + m - 1) // m * m


# ---------------------------------------------------------------------------
# One-time probe: pin pltpu.roll's rotation direction (relative to jnp.roll)
# so the conv lane shifts below stay correct across jax/libtpu versions.
# ---------------------------------------------------------------------------
_ROLL_MATCHES_JNP = None


def _roll_probe_kernel(x_ref, o_ref):
    o_ref[...] = pltpu.roll(x_ref[...], shift=1, axis=1)


def _roll_matches_jnp_roll():
    global _ROLL_MATCHES_JNP
    if _ROLL_MATCHES_JNP is None:
        x = jnp.broadcast_to(jnp.arange(128, dtype=jnp.float32), (8, 128))
        y = pl.pallas_call(
            _roll_probe_kernel,
            out_shape=jax.ShapeDtypeStruct((8, 128), jnp.float32),
        )(x)
        # jnp.roll(x, +1, axis=1) wraps the last lane to the front (== 127).
        _ROLL_MATCHES_JNP = bool(y[0, 0] == 127.0)
    return _ROLL_MATCHES_JNP


# ---------------------------------------------------------------------------
# Kernel
# ---------------------------------------------------------------------------
def _make_cbam_kernel(left1_shift):
    """left1_shift: pltpu.roll amount that shifts lane content left by one."""

    def cbam_kernel(x_ref, mlp_ref, convw_ref, scal_ref, o_ref):
        Bt, H, W, C = x_ref.shape
        Cr = (mlp_ref.shape[0] - 1) // 2          # hidden width of the gate MLP
        Wp = convw_ref.shape[1]                   # lane-padded conv width

        # f32 compute everywhere (v5e has no bf16 VPU/EUP).
        x = x_ref[...].astype(jnp.float32)        # (Bt, H, W, C)

        # ----------------- channel gate (VPU/XLU, no MXU) ------------------
        avg_p = jnp.mean(x, axis=(1, 2))          # (Bt, C)
        max_p = jnp.max(x, axis=(1, 2))           # (Bt, C)

        # mlp(p) = relu(p @ W1.T + b1) @ W2.T + b2, and the gate needs
        # mlp(avg) + mlp(max) = (h_avg + h_max) @ W2.T + 2*b2.
        hsum = []
        for j in range(Cr):
            w1j = mlp_ref[j]                      # (C,)  row j of W1
            b1j = scal_ref[j]
            ha = jnp.maximum(
                jnp.sum(avg_p * w1j, axis=-1, keepdims=True) + b1j, 0.0)
            hm = jnp.maximum(
                jnp.sum(max_p * w1j, axis=-1, keepdims=True) + b1j, 0.0)
            hsum.append(ha + hm)                  # (Bt, 1)

        att = 2.0 * mlp_ref[2 * Cr]               # (C,)   == 2 * b2
        for j in range(Cr):
            att = att + hsum[j] * mlp_ref[Cr + j]  # + h_j * W2[:, j]
        ch_scale = jax.nn.sigmoid(att)            # (Bt, C)
        x1 = x * ch_scale[:, None, None, :]       # (Bt, H, W, C)

        # -------------------------- spatial gate ---------------------------
        cmax = jnp.max(x1, axis=3)                # (Bt, H, W)  channel max
        cmean = jnp.mean(x1, axis=3)              # (Bt, H, W)  channel mean

        # zero-pad by 3 on each side; the W axis lives on (padded) Wp lanes.
        pm = jax.lax.dynamic_update_slice(
            jnp.zeros((Bt, H + 6, Wp), jnp.float32), cmax, (0, 3, 3))
        pa = jax.lax.dynamic_update_slice(
            jnp.zeros((Bt, H + 6, Wp), jnp.float32), cmean, (0, 3, 3))

        # 7x7 conv over the (max, mean) 2-channel map -> 1 channel.
        # dh: static sublane slices; dw: incremental lane rotations (XLU).
        acc = jnp.zeros((Bt, H, Wp), jnp.float32)
        for dh in range(7):
            ms = pm[:, dh:dh + H, :]
            ma = pa[:, dh:dh + H, :]
            for dw in range(7):
                acc = (acc
                       + ms * convw_ref[dh * 7 + dw]
                       + ma * convw_ref[49 + dh * 7 + dw])
                if dw < 6:
                    ms = pltpu.roll(ms, shift=left1_shift, axis=2)
                    ma = pltpu.roll(ma, shift=left1_shift, axis=2)

        # BatchNorm2d(1) in eval mode, folded to scale/shift scalars.
        # TODO(synk): training-mode BN (batch statistics) is not reproduced.
        bn_scale = scal_ref[Cr]
        bn_shift = scal_ref[Cr + 1]
        sp = jax.nn.sigmoid(acc * bn_scale + bn_shift)   # (Bt, H, Wp)
        sp = sp[:, :, :W]                                # (Bt, H, W)

        o_ref[...] = (x1 * sp[..., None]).astype(o_ref.dtype)

    return cbam_kernel


# ---------------------------------------------------------------------------
# Wrapper
# ---------------------------------------------------------------------------
def _pick_batch_tile(B, img_bytes, target_bytes=512 * 1024):
    """Largest batch tile that (a) divides B, (b) keeps >= 2 grid steps when
    B >= 2 (both v7x TensorCores), and (c) stops growing once the per-step
    block reaches ~target_bytes."""
    cap = max(1, B // 2) if B >= 2 else 1
    best = 1
    for bt in range(1, cap + 1):
        if B % bt:
            continue
        best = bt
        if bt * img_bytes >= target_bytes:
            break
    return best


def cbam_forward(x, W1, b1, W2, b2, conv_w_flat, bn_scale, bn_shift,
                 batch_tile=None):
    """Fused CBAM forward.  x is NHWC; W1:(Cr,C), b1:(Cr,), W2:(C,Cr), b2:(C,),
    conv_w_flat:(98,) = 7x7 conv weights for the (max, mean) channels,
    bn_* are the folded eval-mode BatchNorm scale/shift."""
    B, H, W, C = x.shape
    Cr = W1.shape[0]
    assert W1.shape == (Cr, C) and W2.shape == (C, Cr)
    assert b1.shape == (Cr,) and b2.shape == (C,) and conv_w_flat.shape == (98,)

    Wp = max(128, _round_up(W + 6, 128))      # lane-padded conv width
    assert W + 6 <= Wp

    # Pack the small parameters: one tiny VMEM array of (C,)-lane rows and one
    # SMEM scalar vector, instead of 6 separately pipelined operands.
    mlp_vec = jnp.concatenate(
        [W1.astype(jnp.float32),                 # rows 0..Cr-1   : W1[j, :]
         W2.T.astype(jnp.float32),               # rows Cr..2Cr-1 : W2[:, j]
         b2.reshape(1, C).astype(jnp.float32)],  # row  2Cr       : b2
        axis=0)                                  # (2*Cr + 1, C)
    scal = jnp.concatenate(
        [b1.astype(jnp.float32),
         jnp.array([bn_scale, bn_shift], jnp.float32)])           # (Cr + 2,)
    # Pre-broadcast conv taps to full lane width: no per-tap scalar broadcasts
    # inside the 7x7 loop.
    conv_tbl = jnp.broadcast_to(
        conv_w_flat.astype(jnp.float32)[:, None], (98, Wp))       # (98, Wp)

    if batch_tile is None:
        img_bytes = H * W * C * jnp.dtype(x.dtype).itemsize
        batch_tile = _pick_batch_tile(B, img_bytes)
    assert B % batch_tile == 0
    grid = (B // batch_tile,)

    left1 = (Wp - 1) if _roll_matches_jnp_roll() else 1
    kernel = _make_cbam_kernel(left1)

    return pl.pallas_call(
        kernel,
        out_shape=jax.ShapeDtypeStruct((B, H, W, C), x.dtype),
        grid_spec=pltpu.PrefetchScalarGridSpec(
            num_scalar_prefetch=0,
            grid=grid,
            in_specs=[
                pl.BlockSpec((batch_tile, H, W, C), lambda b: (b, 0, 0, 0)),
                pl.BlockSpec((2 * Cr + 1, C), lambda b: (0, 0)),
                pl.BlockSpec((98, Wp), lambda b: (0, 0)),
                pl.BlockSpec(memory_space=pltpu.MemorySpace.SMEM),
            ],
            out_specs=pl.BlockSpec((batch_tile, H, W, C),
                                   lambda b: (b, 0, 0, 0)),
        ),
        compiler_params=pltpu.CompilerParams(
            dimension_semantics=("parallel",),
            vmem_limit_bytes=32 * 1024 * 1024),
    )(x, mlp_vec, conv_tbl, scal)


# ---------------------------------------------------------------------------
# Pure-JAX reference (NHWC), same math as the PyTorch module in eval mode.
# ---------------------------------------------------------------------------
def cbam_reference(x, W1, b1, W2, b2, conv_w_flat, bn_scale, bn_shift):
    hi = jax.lax.Precision.HIGHEST
    avg_p = jnp.mean(x, axis=(1, 2))                         # (B, C)
    max_p = jnp.max(x, axis=(1, 2))                          # (B, C)

    def mlp(p):
        h = jnp.maximum(jnp.dot(p, W1.T, precision=hi) + b1, 0.0)
        return jnp.dot(h, W2.T, precision=hi) + b2

    att = jax.nn.sigmoid(mlp(avg_p) + mlp(max_p))            # (B, C)
    x1 = x * att[:, None, None, :]

    cmax = jnp.max(x1, axis=3, keepdims=True)                # (B, H, W, 1)
    cmean = jnp.mean(x1, axis=3, keepdims=True)
    comp = jnp.concatenate([cmax, cmean], axis=3)            # (B, H, W, 2)
    k = conv_w_flat.reshape(2, 7, 7).transpose(1, 2, 0)[..., None]   # HWIO
    conv = jax.lax.conv_general_dilated(
        comp, k, window_strides=(1, 1), padding=((3, 3), (3, 3)),
        dimension_numbers=("NHWC", "HWIO", "NHWC"), precision=hi)
    sp = jax.nn.sigmoid(conv * bn_scale + bn_shift)          # (B, H, W, 1)
    return x1 * sp


if __name__ == "__main__":
    B, H, W = 2, 16, 16
    gate_channels = 32
    reduction_ratio = 16
    Cr = gate_channels // reduction_ratio                    # 2

    key = jax.random.PRNGKey(0)
    kx, k1, kb1, k2, kb2, kc = jax.random.split(key, 6)

    x = jax.random.normal(kx, (B, H, W, gate_channels), jnp.float32)

    # MLP params (PyTorch nn.Linear convention: weight is (out, in))
    W1 = 0.2 * jax.random.normal(k1, (Cr, gate_channels), jnp.float32)
    b1 = 0.1 * jax.random.normal(kb1, (Cr,), jnp.float32)
    W2 = 0.2 * jax.random.normal(k2, (gate_channels, Cr), jnp.float32)
    b2 = 0.1 * jax.random.normal(kb2, (gate_channels,), jnp.float32)

    # 7x7 conv weight (out=1, in=2: [max, mean]) flattened as (in, kh, kw)
    conv_w = 0.1 * jax.random.normal(kc, (1, 2, 7, 7), jnp.float32)
    conv_w_flat = conv_w.reshape(-1)

    # BatchNorm2d(1) eval-mode params folded into (scale, shift)
    gamma, beta, run_mean, run_var, eps = 0.8, 0.05, 0.02, 1.1, 1e-5
    bn_scale = float(gamma / (run_var + eps) ** 0.5)
    bn_shift = float(beta - run_mean * bn_scale)

    out = cbam_forward(x, W1, b1, W2, b2, conv_w_flat, bn_scale, bn_shift)
    out = jax.block_until_ready(out)

    ref = cbam_reference(x, W1, b1, W2, b2, conv_w_flat, bn_scale, bn_shift)
    assert out.shape == (B, H, W, gate_channels)
    assert jnp.allclose(out, ref, atol=2e-4, rtol=2e-4), "mismatch vs JAX reference"

    print("KERNEL_OK")
</pallas_src>

<mosaic_0001>
module attributes {stable_mosaic.version = 11 : i64} {
  func.func @_roll_probe_kernel(%arg0: memref<8x128xf32, #tpu.memory_space<vmem>>, %arg1: memref<8x128xf32, #tpu.memory_space<vmem>>) attributes {dimension_semantics = [], scalar_prefetch = 0 : i64, scratch_operands = 0 : i64, tpu.core_type = #tpu.core_type<tc>} {
    %c0 = arith.constant 0 : index
    %c0_0 = arith.constant 0 : index
    %0 = vector.load %arg0[%c0, %c0_0] : memref<8x128xf32, #tpu.memory_space<vmem>>, vector<8x128xf32>
    %c1_i32 = arith.constant 1 : i32
    %1 = tpu.dynamic_rotate %0 by %c1_i32 dim 1 : vector<8x128xf32>, i32 -> vector<8x128xf32>
    %c0_1 = arith.constant 0 : index
    %c0_2 = arith.constant 0 : index
    %2 = vector.load %arg1[%c0_1, %c0_2] : memref<8x128xf32, #tpu.memory_space<vmem>>, vector<8x128xf32>
    tpu.vector_store %arg1[%c0_1, %c0_2], %1 {strides = array<i32>} : memref<8x128xf32, #tpu.memory_space<vmem>>, vector<8x128xf32>,
    return
  }
}

</mosaic_0001>

<llo_original>
// kernel: tpu_custom_call.1
$region0: #{tpu_custom_call.1}
  #allocation0 [shape = 'u32[]', space=smem, size = 0x4, offset = 0x4, fixed_abs, tag = 'smem constant byte address 0x4 - core index']
  #allocation1 [shape = 'u32[72,128]{1,0:T(1,128)}', space=vmem, size = 0x9000, scoped, tag = 'internal scratch']
  %s0 = inlined_call_operand.hbm [shape: f32[8,128], index: 0, kind: input, shape index: {}]
  %s1 = inlined_call_operand.hbm [shape: f32[8,128], index: 1, kind: output, shape index: {}]
  %s2 = sld [smem:[#allocation0]]
  $region18: #{tpu_custom_call.1} parent=0
    _
  %s4 = ssub.s32 1, %s2
  %s5 = scalar_select 0, %s4, %s2
  $region1: #{tpu_custom_call.1} parent=0
    #allocation2 [shape = 'u8[4096]{0}', space=vmem, size = 0x1000, scoped, tag = 'input window, operand 0, single buffered']
    #allocation3 [shape = 's32[1]{0}', space=sflag, size = 0x4, scoped, tag = 'scoped memory for tpu_custom_call.1']
    #allocation4 [shape = 's32[1]{0}', space=sflag, size = 0x4, scoped, tag = 'scoped memory for tpu_custom_call.1']
    #allocation5 [shape = 'u8[4096]{0}', space=vmem, size = 0x1000, scoped, tag = 'output window, operand 0, single buffered']
    %6 = vsyncpa [#allocation3], 0
    %7 = vsyncpa [#allocation4], 0
    // Predicated region
    $region2: #{tpu_custom_call.1} parent=1 // pred_check
      _
    $region3: #{tpu_custom_call.1} parent=1 // pred_check_branch
      %9 = sbr.rel (0) target = $region5
    $region4: #{tpu_custom_call.1} parent=1 // pred_region
      %11 = vsyncadd [#allocation3], 0
      %s13 = sshll.u32 %s0, 4
      %s14 = int_to_ptr.hbm [resolvable:$true] %s13
      %s15 = sshll.u32 [#allocation2], 4
      %s16 = int_to_ptr.vmem [resolvable:$true] %s15
      %18 = dma.hbm_to_vmem [thread:$0]  %s14, 128, %s16, [#allocation3]
    $region5: #{tpu_custom_call.1} parent=1 // pred_fallthru
      _
    // Predicated region
    $region6: #{tpu_custom_call.1} parent=1 // pred_check
      _
    $region7: #{tpu_custom_call.1} parent=1 // pred_check_branch
      %20 = sbr.rel (0) target = $region9
    $region8: #{tpu_custom_call.1} parent=1 // pred_region
      %22 = dma.done [#allocation3], 128
    $region9: #{tpu_custom_call.1} parent=1 // pred_fallthru
      _
    %v23 = vld [vmem:[#allocation2] sm:$0xff]
    %24 = vrot.lane.b32.xlu0 %v23, 1
    %v25 = vpop.permute.xlu0 %24
    %26 = vst [vmem:[#allocation5] sm:$0xff] %v25
    // Predicated region
    $region10: #{tpu_custom_call.1} parent=1 // pred_check
      _
    $region11: #{tpu_custom_call.1} parent=1 // pred_check_branch
      %28 = sbr.rel (0) target = $region13
    $region12: #{tpu_custom_call.1} parent=1 // pred_region
      %30 = vsyncadd [#allocation4], 0
      %s32 = sshll.u32 [#allocation5], 4
      %s33 = int_to_ptr.vmem [resolvable:$true] %s32
      %s34 = sshll.u32 %s1, 4
      %s35 = int_to_ptr.hbm [resolvable:$true] %s34
      %37 = dma.vmem_to_hbm [thread:$0]  %s33, 128, %s35, [#allocation4]
    $region13: #{tpu_custom_call.1} parent=1 // pred_fallthru
      _
    // Predicated region
    $region14: #{tpu_custom_call.1} parent=1 // pred_check
      _
    $region15: #{tpu_custom_call.1} parent=1 // pred_check_branch
      %39 = sbr.rel (0) target = $region17
    $region16: #{tpu_custom_call.1} parent=1 // pred_region
      %41 = dma.done [#allocation4], 128
    $region17: #{tpu_custom_call.1} parent=1 // pred_fallthru
      _
    %42 = vsyncpa [#allocation3], 1
    %43 = vsyncpa [#allocation4], 1

</llo_original>
